<compile_context>
chip_gen: v7x
topology: tpu7x:2x2x1
jax: 0.10.0
libtpu: 0.0.40
codegen_flags: <defaults>
</compile_context>

<pallas_src>
import functools
import math

import jax
import jax.numpy as jnp
from jax.experimental import pallas as pl
from jax.experimental.pallas import tpu as pltpu


def _stacked_attention_kernel(x_ref, w_ref, z_ref, p_ref, qkv_scratch,
                              *, n_heads, head_dim, q_tile, seq_len):
    # x_ref       : (1, T, D)        full sequence, resident across q tiles of a batch elem
    # w_ref       : (D, 3*N*Dh)      fused packed QKV weights (grid-invariant -> resident)
    # z_ref       : (1, tq, N*Dh)    lane-dense fused-head output tile
    # p_ref       : (1, N, tq, T)    per-head attention weights for this q tile
    # qkv_scratch : (T, 3*N*Dh) f32  fused projection, computed once per batch element
    qi = pl.program_id(1)
    n_dh = n_heads * head_dim

    # Fused QKV projection: ONE lane-dense (T, D) x (D, 3*N*Dh) matmul per batch element.
    @pl.when(qi == 0)
    def _():
        qkv_scratch[...] = jnp.dot(x_ref[0], w_ref[...],
                                   preferred_element_type=jnp.float32)

    q_start = pl.multiple_of(qi * q_tile, q_tile)
    # q rows for this tile, scaled once by 1/sqrt(Dh) (cheaper than scaling (tq, T) scores).
    q_all = qkv_scratch[pl.ds(q_start, q_tile), :n_dh] * (1.0 / math.sqrt(head_dim))

    # Causal (lower-triangular) mask for this tile, hoisted out of the head loop.
    row = jax.lax.broadcasted_iota(jnp.int32, (q_tile, seq_len), 0) + q_start
    col = jax.lax.broadcasted_iota(jnp.int32, (q_tile, seq_len), 1)
    causal = col <= row

    # Static (unrolled) head loop: per-head operands are static lane slices of the resident
    # packed projection; z / p are stored immediately, so nothing stays live across heads.
    for h in range(n_heads):
        lo = h * head_dim
        hi = lo + head_dim
        qh = q_all[:, lo:hi]                                   # (tq, Dh)
        kh = qkv_scratch[:, n_dh + lo:n_dh + hi]               # (T, Dh)
        vh = qkv_scratch[:, 2 * n_dh + lo:2 * n_dh + hi]       # (T, Dh)

        # QK^T as a contracting-dim dot_general: k.T is never materialized.
        s = jax.lax.dot_general(qh, kh, (((1,), (1,)), ((), ())),
                                preferred_element_type=jnp.float32)   # (tq, T)
        s = jnp.where(causal, s, -1e30)

        # Numerically-stable softmax (the module's "no NaN" contract).
        s = s - jnp.max(s, axis=-1, keepdims=True)
        p = jnp.exp(s)
        # Exact reciprocal keeps sum(weights) == 1 at f32 precision; approx=True (EUP vrcp)
        # is a valid swap if that contract can relax to ~1e-3.
        p = p * pl.reciprocal(jnp.sum(p, axis=-1, keepdims=True), approx=False)

        p_ref[0, h] = p.astype(p_ref.dtype)
        # Per-head z written straight into its lane slice (no list + concatenate).
        z_ref[0, :, lo:hi] = jnp.dot(
            p, vh, preferred_element_type=jnp.float32).astype(z_ref.dtype)


def stacked_masked_self_attention(x, wq, wk, wv, *, q_tile=None, weights_dtype=None):
    """x: (B, T, D); wq/wk/wv: (N, D, Dh) -> (z: (B, N, T, Dh), weights: (B, N, T, T)).

    `weights_dtype` (e.g. jnp.bfloat16) halves the O(B*N*T^2) attention-weights HBM
    writeback when the weights are only needed for inspection (relaxes sum-to-1 precision).
    """
    B, T, D = x.shape
    N, _, Dh = wq.shape
    NDh = N * Dh
    weights_dtype = x.dtype if weights_dtype is None else weights_dtype

    # Query-tile size: whole sequence for small T, otherwise 128-row tiles.
    if q_tile is None:
        q_tile = T if T <= 128 else 128
    assert T % q_tile == 0, "q_tile must divide T"
    num_q_tiles = T // q_tile

    # Pack heads into the lane dimension and fuse Q/K/V: (D, 3*N*Dh).
    def _pack(w):
        return jnp.transpose(w, (1, 0, 2)).reshape(D, NDh)

    w_qkv = jnp.concatenate([_pack(wq), _pack(wk), _pack(wv)], axis=1)

    kernel = functools.partial(_stacked_attention_kernel,
                               n_heads=N, head_dim=Dh, q_tile=q_tile, seq_len=T)

    z_slab, weights = pl.pallas_call(
        kernel,
        out_shape=(
            jax.ShapeDtypeStruct((B, T, NDh), x.dtype),
            jax.ShapeDtypeStruct((B, N, T, T), weights_dtype),
        ),
        grid_spec=pltpu.PrefetchScalarGridSpec(
            num_scalar_prefetch=0,
            grid=(B, num_q_tiles),
            in_specs=[
                # x is invariant across q tiles -> DMA'd once per batch element.
                pl.BlockSpec((1, T, D), lambda b, qi: (b, 0, 0)),
                # Fused weights are grid-invariant -> resident in VMEM for the whole call.
                pl.BlockSpec((D, 3 * NDh), lambda b, qi: (0, 0)),
            ],
            out_specs=[
                pl.BlockSpec((1, q_tile, NDh), lambda b, qi: (b, qi, 0)),
                pl.BlockSpec((1, N, q_tile, T), lambda b, qi: (b, 0, qi, 0)),
            ],
            scratch_shapes=[pltpu.VMEM((T, 3 * NDh), jnp.float32)],
        ),
        compiler_params=pltpu.CompilerParams(
            # Batch axis parallel (v7x 2-TC split); q-tile axis sequential because the
            # QKV scratch is computed at qi == 0 and reused by later tiles.
            dimension_semantics=("parallel", "arbitrary"),
            vmem_limit_bytes=48 * 1024 * 1024,
        ),
    )(x, w_qkv)

    # Layout plumbing back to the module's stacking convention (B, N, T, Dh).
    z = z_slab.reshape(B, T, N, Dh).transpose(0, 2, 1, 3)
    return z, weights


def _reference(x, wq, wk, wv):
    # Pure-JAX reference of the stacked masked self-attention.
    B, T, D = x.shape
    N, _, Dh = wq.shape
    q = jnp.einsum("btd,ndh->bnth", x, wq)
    k = jnp.einsum("btd,ndh->bnth", x, wk)
    v = jnp.einsum("btd,ndh->bnth", x, wv)
    s = jnp.einsum("bnqh,bnkh->bnqk", q, k) / math.sqrt(Dh)
    mask = jnp.tril(jnp.ones((T, T), dtype=bool))
    s = jnp.where(mask, s, -1e30)
    p = jax.nn.softmax(s, axis=-1)
    z = jnp.einsum("bnqk,bnkh->bnqh", p, v)
    return z, p


if __name__ == "__main__":
    # Small shapes consistent with the module: batch=2, N=4 heads, seq=8, embed=32,
    # head_dim=32  (N*Dh = 128 -> lane-dense packed projections, 3*N*Dh = 384 fused lanes).
    B, N, T, D, Dh = 2, 4, 8, 32, 32

    key = jax.random.PRNGKey(0)
    kx, kq, kk, kv = jax.random.split(key, 4)

    x = jax.random.normal(kx, (B, T, D), dtype=jnp.float32)
    # Deterministic nn.Linear-style init: U(-1/sqrt(D), 1/sqrt(D)), bias=False.
    bound = 1.0 / math.sqrt(D)
    wq = jax.random.uniform(kq, (N, D, Dh), jnp.float32, -bound, bound)
    wk = jax.random.uniform(kk, (N, D, Dh), jnp.float32, -bound, bound)
    wv = jax.random.uniform(kv, (N, D, Dh), jnp.float32, -bound, bound)

    z, w = jax.jit(stacked_masked_self_attention)(x, wq, wk, wv)
    jax.block_until_ready((z, w))

    z_ref, w_ref = _reference(x, wq, wk, wv)
    assert z.shape == (B, N, T, Dh) and w.shape == (B, N, T, T)
    assert jnp.allclose(z, z_ref, atol=1e-4, rtol=1e-4)
    assert jnp.allclose(w, w_ref, atol=1e-4, rtol=1e-4)
    # Attention weights are a proper distribution (no NaNs, exact softmax).
    assert jnp.allclose(jnp.sum(w, axis=-1), 1.0, atol=1e-5)

    print("KERNEL_OK")
</pallas_src>

<mosaic_0001>
module attributes {stable_mosaic.version = 11 : i64} {
  func.func @_stacked_attention_kernel(%arg0: i32, %arg1: i32, %arg2: memref<1x8x32xf32, #tpu.memory_space<vmem>>, %arg3: memref<32x384xf32, #tpu.memory_space<vmem>>, %arg4: memref<1x8x128xf32, #tpu.memory_space<vmem>>, %arg5: memref<1x4x8x8xf32, #tpu.memory_space<vmem>>, %arg6: memref<8x384xf32, #tpu.memory_space<vmem>>) attributes {dimension_semantics = [#tpu.dimension_semantics<parallel>, #tpu.dimension_semantics<arbitrary>], iteration_bounds = array<i64: 2, 1>, scalar_prefetch = 0 : i64, scratch_operands = 1 : i64, tpu.core_type = #tpu.core_type<tc>, window_params = [{transform_indices = @transform_0, window_bounds = array<i64: 1, 8, 32>}, {pipeline_mode = #tpu.pipeline_mode<synchronous>, transform_indices = @transform_1, window_bounds = array<i64: 32, 384>}, {transform_indices = @transform_2, window_bounds = array<i64: 1, 8, 128>}, {transform_indices = @transform_3, window_bounds = array<i64: 1, 4, 8, 8>}]} {
    %c0_i32 = arith.constant 0 : i32
    %0 = arith.cmpi eq, %arg1, %c0_i32 : i32
    %1 = arith.extui %0 : i1 to i32
    %c0_i32_0 = arith.constant 0 : i32
    %2 = arith.cmpi ne, %1, %c0_i32_0 : i32
    scf.if %2 {
      %c0_51 = arith.constant 0 : index
      %c0_52 = arith.constant 0 : index
      %c0_53 = arith.constant 0 : index
      %106 = vector.load %arg2[%c0_51, %c0_52, %c0_53] : memref<1x8x32xf32, #tpu.memory_space<vmem>>, vector<1x8x32xf32>
      %107 = vector.shape_cast %106 : vector<1x8x32xf32> to vector<8x32xf32>
      %c0_54 = arith.constant 0 : index
      %c0_55 = arith.constant 0 : index
      %108 = vector.load %arg3[%c0_54, %c0_55] : memref<32x384xf32, #tpu.memory_space<vmem>>, vector<32x384xf32>
      %cst_56 = arith.constant dense<0.000000e+00> : vector<8x384xf32>
      %109 = tpu.matmul %107, %108, %cst_56 {dimension_numbers = #tpu.dot_dimension_numbers<[1], [0], [0], [1], [0, 0, 1, 1], [], []>} : vector<8x32xf32>, vector<32x384xf32>, vector<8x384xf32> -> vector<8x384xf32>
      %c0_57 = arith.constant 0 : index
      %c0_58 = arith.constant 0 : index
      %110 = vector.load %arg6[%c0_57, %c0_58] : memref<8x384xf32, #tpu.memory_space<vmem>>, vector<8x384xf32>
      tpu.vector_store %arg6[%c0_57, %c0_58], %109 {strides = array<i32>} : memref<8x384xf32, #tpu.memory_space<vmem>>, vector<8x384xf32>,
    } else {
    }
    %c8_i32 = arith.constant 8 : i32
    %3 = arith.muli %arg1, %c8_i32 : i32
    %4 = tpu.assume_multiple %3, 8 : i32
    %5 = arith.index_cast %4 : i32 to index
    %c0 = arith.constant 0 : index
    %6 = vector.load %arg6[%5, %c0] : memref<8x384xf32, #tpu.memory_space<vmem>>, vector<8x128xf32>
    %cst = arith.constant 0.176776692 : f32
    %7 = vector.broadcast %cst : f32 to vector<8x128xf32>
    %8 = arith.mulf %6, %7 : vector<8x128xf32>
    %9 = tpu.iota {dimensions = array<i32: 0>} : vector<8x8xi32>
    %10 = vector.broadcast %4 : i32 to vector<8x8xi32>
    %11 = arith.addi %9, %10 : vector<8x8xi32>
    %12 = tpu.iota {dimensions = array<i32: 1>} : vector<8x8xi32>
    %13 = arith.cmpi sle, %12, %11 : vector<8x8xi32>
    %14 = vector.extract_strided_slice %8 {offsets = [0, 0], sizes = [8, 32], strides = [1, 1]} : vector<8x128xf32> to vector<8x32xf32>
    %c0_1 = arith.constant 0 : index
    %c128 = arith.constant 128 : index
    %15 = vector.load %arg6[%c0_1, %c128] : memref<8x384xf32, #tpu.memory_space<vmem>>, vector<8x32xf32>
    %c0_2 = arith.constant 0 : index
    %c256 = arith.constant 256 : index
    %16 = vector.load %arg6[%c0_2, %c256] : memref<8x384xf32, #tpu.memory_space<vmem>>, vector<8x32xf32>
    %cst_3 = arith.constant dense<0.000000e+00> : vector<8x8xf32>
    %17 = tpu.matmul %14, %15, %cst_3 {dimension_numbers = #tpu.dot_dimension_numbers<[1], [1], [0], [0], [0, 0, 1, 0], [], []>} : vector<8x32xf32>, vector<8x32xf32>, vector<8x8xf32> -> vector<8x8xf32>
    %cst_4 = arith.constant -1.000000e+30 : f32
    %18 = vector.broadcast %cst_4 : f32 to vector<8x8xf32>
    %19 = arith.select %13, %17, %18 : vector<8x8xi1>, vector<8x8xf32>
    %cst_5 = arith.constant dense<0xFF800000> : vector<8xf32>
    %20 = vector.multi_reduction <maximumf>, %19, %cst_5 [1] : vector<8x8xf32> to vector<8xf32>
    %21 = vector.shape_cast %20 : vector<8xf32> to vector<8x1xf32>
    %22 = vector.broadcast %21 : vector<8x1xf32> to vector<8x8xf32>
    %23 = arith.subf %19, %22 : vector<8x8xf32>
    %24 = math.exp %23 : vector<8x8xf32>
    %cst_6 = arith.constant dense<0.000000e+00> : vector<8xf32>
    %25 = vector.multi_reduction <add>, %24, %cst_6 [1] : vector<8x8xf32> to vector<8xf32>
    %26 = vector.shape_cast %25 : vector<8xf32> to vector<8x1xf32>
    %27 = tpu.reciprocal %26 : vector<8x1xf32> -> vector<8x1xf32>
    %28 = vector.broadcast %27 : vector<8x1xf32> to vector<8x8xf32>
    %29 = arith.mulf %24, %28 : vector<8x8xf32>
    %c0_7 = arith.constant 0 : index
    %c0_8 = arith.constant 0 : index
    %c0_9 = arith.constant 0 : index
    %c0_10 = arith.constant 0 : index
    %30 = vector.load %arg5[%c0_7, %c0_8, %c0_9, %c0_10] : memref<1x4x8x8xf32, #tpu.memory_space<vmem>>, vector<1x1x8x8xf32>
    %31 = vector.shape_cast %30 : vector<1x1x8x8xf32> to vector<8x8xf32>
    %32 = vector.shape_cast %29 : vector<8x8xf32> to vector<1x1x8x8xf32>
    tpu.vector_store %arg5[%c0_7, %c0_8, %c0_9, %c0_10], %32 {strides = array<i32>} : memref<1x4x8x8xf32, #tpu.memory_space<vmem>>, vector<1x1x8x8xf32>,
    %cst_11 = arith.constant dense<0.000000e+00> : vector<8x32xf32>
    %33 = tpu.matmul %29, %16, %cst_11 {dimension_numbers = #tpu.dot_dimension_numbers<[1], [0], [0], [1], [0, 0, 1, 1], [], []>} : vector<8x8xf32>, vector<8x32xf32>, vector<8x32xf32> -> vector<8x32xf32>
    %c0_12 = arith.constant 0 : index
    %c0_13 = arith.constant 0 : index
    %c0_14 = arith.constant 0 : index
    %34 = vector.load %arg4[%c0_12, %c0_13, %c0_14] : memref<1x8x128xf32, #tpu.memory_space<vmem>>, vector<1x8x32xf32>
    %35 = vector.shape_cast %34 : vector<1x8x32xf32> to vector<8x32xf32>
    %36 = vector.shape_cast %33 : vector<8x32xf32> to vector<1x8x32xf32>
    tpu.vector_store %arg4[%c0_12, %c0_13, %c0_14], %36 {strides = array<i32>} : memref<1x8x128xf32, #tpu.memory_space<vmem>>, vector<1x8x32xf32>,
    %37 = vector.extract_strided_slice %8 {offsets = [0, 32], sizes = [8, 32], strides = [1, 1]} : vector<8x128xf32> to vector<8x32xf32>
    %c0_15 = arith.constant 0 : index
    %c160 = arith.constant 160 : index
    %38 = vector.load %arg6[%c0_15, %c160] : memref<8x384xf32, #tpu.memory_space<vmem>>, vector<8x32xf32>
    %c0_16 = arith.constant 0 : index
    %c288 = arith.constant 288 : index
    %39 = vector.load %arg6[%c0_16, %c288] : memref<8x384xf32, #tpu.memory_space<vmem>>, vector<8x32xf32>
    %cst_17 = arith.constant dense<0.000000e+00> : vector<8x8xf32>
    %40 = tpu.matmul %37, %38, %cst_17 {dimension_numbers = #tpu.dot_dimension_numbers<[1], [1], [0], [0], [0, 0, 1, 0], [], []>} : vector<8x32xf32>, vector<8x32xf32>, vector<8x8xf32> -> vector<8x8xf32>
    %cst_18 = arith.constant -1.000000e+30 : f32
    %41 = vector.broadcast %cst_18 : f32 to vector<8x8xf32>
    %42 = arith.select %13, %40, %41 : vector<8x8xi1>, vector<8x8xf32>
    %cst_19 = arith.constant dense<0xFF800000> : vector<8xf32>
    %43 = vector.multi_reduction <maximumf>, %42, %cst_19 [1] : vector<8x8xf32> to vector<8xf32>
    %44 = vector.shape_cast %43 : vector<8xf32> to vector<8x1xf32>
    %45 = vector.broadcast %44 : vector<8x1xf32> to vector<8x8xf32>
    %46 = arith.subf %42, %45 : vector<8x8xf32>
    %47 = math.exp %46 : vector<8x8xf32>
    %cst_20 = arith.constant dense<0.000000e+00> : vector<8xf32>
    %48 = vector.multi_reduction <add>, %47, %cst_20 [1] : vector<8x8xf32> to vector<8xf32>
    %49 = vector.shape_cast %48 : vector<8xf32> to vector<8x1xf32>
    %50 = tpu.reciprocal %49 : vector<8x1xf32> -> vector<8x1xf32>
    %51 = vector.broadcast %50 : vector<8x1xf32> to vector<8x8xf32>
    %52 = arith.mulf %47, %51 : vector<8x8xf32>
    %c0_21 = arith.constant 0 : index
    %c1 = arith.constant 1 : index
    %c0_22 = arith.constant 0 : index
    %c0_23 = arith.constant 0 : index
    %53 = vector.load %arg5[%c0_21, %c1, %c0_22, %c0_23] : memref<1x4x8x8xf32, #tpu.memory_space<vmem>>, vector<1x1x8x8xf32>
    %54 = vector.shape_cast %53 : vector<1x1x8x8xf32> to vector<8x8xf32>
    %55 = vector.shape_cast %52 : vector<8x8xf32> to vector<1x1x8x8xf32>
    tpu.vector_store %arg5[%c0_21, %c1, %c0_22, %c0_23], %55 {strides = array<i32>} : memref<1x4x8x8xf32, #tpu.memory_space<vmem>>, vector<1x1x8x8xf32>,
    %cst_24 = arith.constant dense<0.000000e+00> : vector<8x32xf32>
    %56 = tpu.matmul %52, %39, %cst_24 {dimension_numbers = #tpu.dot_dimension_numbers<[1], [0], [0], [1], [0, 0, 1, 1], [], []>} : vector<8x8xf32>, vector<8x32xf32>, vector<8x32xf32> -> vector<8x32xf32>
    %c0_25 = arith.constant 0 : index
    %c0_26 = arith.constant 0 : index
    %c32 = arith.constant 32 : index
    %57 = vector.load %arg4[%c0_25, %c0_26, %c32] : memref<1x8x128xf32, #tpu.memory_space<vmem>>, vector<1x8x32xf32>
    %58 = vector.shape_cast %57 : vector<1x8x32xf32> to vector<8x32xf32>
    %59 = vector.shape_cast %56 : vector<8x32xf32> to vector<1x8x32xf32>
    tpu.vector_store %arg4[%c0_25, %c0_26, %c32], %59 {strides = array<i32>} : memref<1x8x128xf32, #tpu.memory_space<vmem>>, vector<1x8x32xf32>,
    %60 = vector.extract_strided_slice %8 {offsets = [0, 64], sizes = [8, 32], strides = [1, 1]} : vector<8x128xf32> to vector<8x32xf32>
    %c0_27 = arith.constant 0 : index
    %c192 = arith.constant 192 : index
    %61 = vector.load %arg6[%c0_27, %c192] : memref<8x384xf32, #tpu.memory_space<vmem>>, vector<8x32xf32>
    %c0_28 = arith.constant 0 : index
    %c320 = arith.constant 320 : index
    %62 = vector.load %arg6[%c0_28, %c320] : memref<8x384xf32, #tpu.memory_space<vmem>>, vector<8x32xf32>
    %cst_29 = arith.constant dense<0.000000e+00> : vector<8x8xf32>
    %63 = tpu.matmul %60, %61, %cst_29 {dimension_numbers = #tpu.dot_dimension_numbers<[1], [1], [0], [0], [0, 0, 1, 0], [], []>} : vector<8x32xf32>, vector<8x32xf32>, vector<8x8xf32> -> vector<8x8xf32>
    %cst_30 = arith.constant -1.000000e+30 : f32
    %64 = vector.broadcast %cst_30 : f32 to vector<8x8xf32>
    %65 = arith.select %13, %63, %64 : vector<8x8xi1>, vector<8x8xf32>
    %cst_31 = arith.constant dense<0xFF800000> : vector<8xf32>
    %66 = vector.multi_reduction <maximumf>, %65, %cst_31 [1] : vector<8x8xf32> to vector<8xf32>
    %67 = vector.shape_cast %66 : vector<8xf32> to vector<8x1xf32>
    %68 = vector.broadcast %67 : vector<8x1xf32> to vector<8x8xf32>
    %69 = arith.subf %65, %68 : vector<8x8xf32>
    %70 = math.exp %69 : vector<8x8xf32>
    %cst_32 = arith.constant dense<0.000000e+00> : vector<8xf32>
    %71 = vector.multi_reduction <add>, %70, %cst_32 [1] : vector<8x8xf32> to vector<8xf32>
    %72 = vector.shape_cast %71 : vector<8xf32> to vector<8x1xf32>
    %73 = tpu.reciprocal %72 : vector<8x1xf32> -> vector<8x1xf32>
    %74 = vector.broadcast %73 : vector<8x1xf32> to vector<8x8xf32>
    %75 = arith.mulf %70, %74 : vector<8x8xf32>
    %c0_33 = arith.constant 0 : index
    %c2 = arith.constant 2 : index
    %c0_34 = arith.constant 0 : index
    %c0_35 = arith.constant 0 : index
    %76 = vector.load %arg5[%c0_33, %c2, %c0_34, %c0_35] : memref<1x4x8x8xf32, #tpu.memory_space<vmem>>, vector<1x1x8x8xf32>
    %77 = vector.shape_cast %76 : vector<1x1x8x8xf32> to vector<8x8xf32>
    %78 = vector.shape_cast %75 : vector<8x8xf32> to vector<1x1x8x8xf32>
    tpu.vector_store %arg5[%c0_33, %c2, %c0_34, %c0_35], %78 {strides = array<i32>} : memref<1x4x8x8xf32, #tpu.memory_space<vmem>>, vector<1x1x8x8xf32>,
    %cst_36 = arith.constant dense<0.000000e+00> : vector<8x32xf32>
    %79 = tpu.matmul %75, %62, %cst_36 {dimension_numbers = #tpu.dot_dimension_numbers<[1], [0], [0], [1], [0, 0, 1, 1], [], []>} : vector<8x8xf32>, vector<8x32xf32>, vector<8x32xf32> -> vector<8x32xf32>
    %c0_37 = arith.constant 0 : index
    %c0_38 = arith.constant 0 : index
    %c64 = arith.constant 64 : index
    %80 = vector.load %arg4[%c0_37, %c0_38, %c64] : memref<1x8x128xf32, #tpu.memory_space<vmem>>, vector<1x8x32xf32>
    %81 = vector.shape_cast %80 : vector<1x8x32xf32> to vector<8x32xf32>
    %82 = vector.shape_cast %79 : vector<8x32xf32> to vector<1x8x32xf32>
    tpu.vector_store %arg4[%c0_37, %c0_38, %c64], %82 {strides = array<i32>} : memref<1x8x128xf32, #tpu.memory_space<vmem>>, vector<1x8x32xf32>,
    %83 = vector.extract_strided_slice %8 {offsets = [0, 96], sizes = [8, 32], strides = [1, 1]} : vector<8x128xf32> to vector<8x32xf32>
    %c0_39 = arith.constant 0 : index
    %c224 = arith.constant 224 : index
    %84 = vector.load %arg6[%c0_39, %c224] : memref<8x384xf32, #tpu.memory_space<vmem>>, vector<8x32xf32>
    %c0_40 = arith.constant 0 : index
    %c352 = arith.constant 352 : index
    %85 = vector.load %arg6[%c0_40, %c352] : memref<8x384xf32, #tpu.memory_space<vmem>>, vector<8x32xf32>
    %cst_41 = arith.constant dense<0.000000e+00> : vector<8x8xf32>
    %86 = tpu.matmul %83, %84, %cst_41 {dimension_numbers = #tpu.dot_dimension_numbers<[1], [1], [0], [0], [0, 0, 1, 0], [], []>} : vector<8x32xf32>, vector<8x32xf32>, vector<8x8xf32> -> vector<8x8xf32>
    %cst_42 = arith.constant -1.000000e+30 : f32
    %87 = vector.broadcast %cst_42 : f32 to vector<8x8xf32>
    %88 = arith.select %13, %86, %87 : vector<8x8xi1>, vector<8x8xf32>
    %cst_43 = arith.constant dense<0xFF800000> : vector<8xf32>
    %89 = vector.multi_reduction <maximumf>, %88, %cst_43 [1] : vector<8x8xf32> to vector<8xf32>
    %90 = vector.shape_cast %89 : vector<8xf32> to vector<8x1xf32>
    %91 = vector.broadcast %90 : vector<8x1xf32> to vector<8x8xf32>
    %92 = arith.subf %88, %91 : vector<8x8xf32>
    %93 = math.exp %92 : vector<8x8xf32>
    %cst_44 = arith.constant dense<0.000000e+00> : vector<8xf32>
    %94 = vector.multi_reduction <add>, %93, %cst_44 [1] : vector<8x8xf32> to vector<8xf32>
    %95 = vector.shape_cast %94 : vector<8xf32> to vector<8x1xf32>
    %96 = tpu.reciprocal %95 : vector<8x1xf32> -> vector<8x1xf32>
    %97 = vector.broadcast %96 : vector<8x1xf32> to vector<8x8xf32>
    %98 = arith.mulf %93, %97 : vector<8x8xf32>
    %c0_45 = arith.constant 0 : index
    %c3 = arith.constant 3 : index
    %c0_46 = arith.constant 0 : index
    %c0_47 = arith.constant 0 : index
    %99 = vector.load %arg5[%c0_45, %c3, %c0_46, %c0_47] : memref<1x4x8x8xf32, #tpu.memory_space<vmem>>, vector<1x1x8x8xf32>
    %100 = vector.shape_cast %99 : vector<1x1x8x8xf32> to vector<8x8xf32>
    %101 = vector.shape_cast %98 : vector<8x8xf32> to vector<1x1x8x8xf32>
    tpu.vector_store %arg5[%c0_45, %c3, %c0_46, %c0_47], %101 {strides = array<i32>} : memref<1x4x8x8xf32, #tpu.memory_space<vmem>>, vector<1x1x8x8xf32>,
    %cst_48 = arith.constant dense<0.000000e+00> : vector<8x32xf32>
    %102 = tpu.matmul %98, %85, %cst_48 {dimension_numbers = #tpu.dot_dimension_numbers<[1], [0], [0], [1], [0, 0, 1, 1], [], []>} : vector<8x8xf32>, vector<8x32xf32>, vector<8x32xf32> -> vector<8x32xf32>
    %c0_49 = arith.constant 0 : index
    %c0_50 = arith.constant 0 : index
    %c96 = arith.constant 96 : index
    %103 = vector.load %arg4[%c0_49, %c0_50, %c96] : memref<1x8x128xf32, #tpu.memory_space<vmem>>, vector<1x8x32xf32>
    %104 = vector.shape_cast %103 : vector<1x8x32xf32> to vector<8x32xf32>
    %105 = vector.shape_cast %102 : vector<8x32xf32> to vector<1x8x32xf32>
    tpu.vector_store %arg4[%c0_49, %c0_50, %c96], %105 {strides = array<i32>} : memref<1x8x128xf32, #tpu.memory_space<vmem>>, vector<1x8x32xf32>,
    return
  }
  func.func @transform_0(%arg0: i32, %arg1: i32) -> (i32, i32, i32) {
    %c0_i32 = arith.constant 0 : i32
    %c0_i32_0 = arith.constant 0 : i32
    %c0_i32_1 = arith.constant 0 : i32
    return %arg0, %c0_i32, %c0_i32_0 : i32, i32, i32
  }
  func.func @transform_1(%arg0: i32, %arg1: i32) -> (i32, i32) {
    %c0_i32 = arith.constant 0 : i32
    %c0_i32_0 = arith.constant 0 : i32
    %c0_i32_1 = arith.constant 0 : i32
    return %c0_i32, %c0_i32_0 : i32, i32
  }
  func.func @transform_2(%arg0: i32, %arg1: i32) -> (i32, i32, i32) {
    %c0_i32 = arith.constant 0 : i32
    %c0_i32_0 = arith.constant 0 : i32
    return %arg0, %arg1, %c0_i32 : i32, i32, i32
  }
  func.func @transform_3(%arg0: i32, %arg1: i32) -> (i32, i32, i32, i32) {
    %c0_i32 = arith.constant 0 : i32
    %c0_i32_0 = arith.constant 0 : i32
    %c0_i32_1 = arith.constant 0 : i32
    return %arg0, %c0_i32, %arg1, %c0_i32_0 : i32, i32, i32, i32
  }
}

</mosaic_0001>

<llo_original>
// kernel: stacked_masked_self_attention.1
$region0: #{stacked_masked_self_attention.1}
  #allocation0 [shape = 'u32[]', space=smem, size = 0x4, offset = 0x4, fixed_abs, tag = 'smem constant byte address 0x4 - core index']
  #allocation1 [shape = 'u32[144,128]{1,0:T(1,128)}', space=vmem, size = 0x12000, scoped, tag = 'internal scratch']
  #allocation2 [shape = 'f32[8,384]{1,0:T(8,128)}', space=vmem, size = 0x3000, scoped, tag = 'scratch operand']
  %s0 = inlined_call_operand.vmem [shape: f32[2,8,32], index: 0, kind: input, shape index: {}]
  %s1 = inlined_call_operand.vmem [shape: f32[32,384], index: 1, kind: input, shape index: {}]
  %s2 = inlined_call_operand.vmem [shape: f32[2,8,128], index: 2, kind: output, shape index: {0}]
  %s3 = inlined_call_operand.hbm [shape: f32[2,4,8,8], index: 3, kind: output, shape index: {1}]
  %4 = xla_tuple %s2, %s3
  %s5 = sld [smem:[#allocation0]]
  $region53: #{stacked_masked_self_attention.1} parent=0
    _
  %s7 = ssub.s32 1, %s5
  %s8 = scalar_select 0, %s7, %s5
  $region1: #{stacked_masked_self_attention.1} parent=0
    #allocation3 [shape = 'u8[32768]{0}', space=vmem, size = 0x8000, scoped, tag = 'output window, operand 1']
    #allocation4 [shape = 's32[2]{0}', space=sflag, size = 0x8, scoped, tag = 'scoped memory for stacked_masked_self_attention.1']
    %9 = vsyncpa [#allocation4], 0
    %s10 = scalar_lea.sflag [#allocation4], 1
    %11 = vsyncpa %s10, 0
    loop: start=0, step=1, limit=4
    $region2: #{stacked_masked_self_attention.1} parent=1 // loop_pre_header
      _
    $region3: #{stacked_masked_self_attention.1} parent=1 // loop_header
      %s13 = sphi 0, %s17
      %p14 = scmp.ge.s32.totalorder %s13, 4
      %s20 = sphi 0, %s32
      %s21 = sphi 0, %s28
      %s22 = sphi 0, %s20
      %s23 = sphi 0, %s21
      %s24 = sphi 0, %s22
      %s25 = sphi 0, %s23
      %s35 = sphi 0, %s37
      %s38 = sphi 0, %s35
      %s39 = sphi 0, %s38
      %s55 = sphi 0, %s39
      %s59 = sphi 0, %s59
      %s61 = sphi 0, %s59
      %s62 = sphi 0, %s61
      %s76 = sphi 0, %s62
      %s84 = sphi 0, %s86
      %s87 = sphi 0, %s84
      %s88 = sphi 0, %s87
      %s104 = sphi 0, %s88
      %s112 = sphi 0, %s114
      %s115 = sphi 0, %s112
      %s116 = sphi 0, %s115
      %s132 = sphi 0, %s116
    $region4: #{stacked_masked_self_attention.1} parent=1 // loop_header_branch
      %16 = sbr.rel (%p14) target = $region8
    $region5: #{stacked_masked_self_attention.1} parent=1 // loop_body
      %s18 = ssub.s32 %s13, 1
      %s19 = ssub.s32 %s13, 2
      %s26 = sadd.s32 1, %s21
      %p27 = scmp.ge.s32.totalorder %s26, 1
      %s28 = scalar_select %p27, 0, %s26
      %s29 = sadd.s32 1, %s20
      %s30 = scalar_select %p27, %s29, %s20
      %p31 = scmp.ge.s32.totalorder %s30, 2
      %s32 = scalar_select %p31, 0, %s30
      %s33 = ssub.s32 %s20, %s32
      %p34 = scmp.eq.s32.totalorder %s33, 0
      %s36 = sadd.s32 %s35, 1
      %s37 = scalar_select %p34, %s35, %s36
      %p40 = pneg %p34
      %p41 = scmp.eq.s32.totalorder %s13, 1
      %p42 = por %p40, %p41
      %p43 = scmp.ne.s32.totalorder %s35, %s38
      %p44 = scmp.eq.s32.totalorder %s13, 0
      %p45 = por %p43, %p44
      %p46 = scmp.ne.s32.totalorder %s35, %s38
      %p47 = scmp.eq.s32.totalorder %s18, 1
      %p48 = por %p46, %p47
      %p49 = scmp.ne.s32.totalorder %s38, %s39
      %p50 = scmp.eq.s32.totalorder %s18, 0
      %p51 = por %p49, %p50
      %p52 = scmp.ne.s32.totalorder %s38, %s39
      %p53 = scmp.eq.s32.totalorder %s19, 1
      %p54 = por %p52, %p53
      %p56 = scmp.ne.s32.totalorder %s39, %s55
      %p57 = scmp.eq.s32.totalorder %s19, 0
      %p58 = por %p56, %p57
      %s60 = sadd.s32 %s59, 1
      %p63 = scmp.eq.s32.totalorder %s13, 1
      %p64 = scmp.ne.s32.totalorder %s59, %s61
      %p65 = scmp.eq.s32.totalorder %s13, 0
      %p66 = por %p64, %p65
      %p67 = scmp.ne.s32.totalorder %s59, %s61
      %p68 = scmp.eq.s32.totalorder %s18, 1
      %p69 = por %p67, %p68
      %p70 = scmp.ne.s32.totalorder %s61, %s62
      %p71 = scmp.eq.s32.totalorder %s18, 0
      %p72 = por %p70, %p71
      %p73 = scmp.ne.s32.totalorder %s61, %s62
      %p74 = scmp.eq.s32.totalorder %s19, 1
      %p75 = por %p73, %p74
      %p77 = scmp.ne.s32.totalorder %s62, %s76
      %p78 = scmp.eq.s32.totalorder %s19, 0
      %p79 = por %p77, %p78
      %s80 = ssub.s32 %s20, %s32
      %s81 = ssub.s32 %s21, %s28
      %s82 = sor.u32 %s80, %s81
      %p83 = scmp.eq.s32.totalorder %s82, 0
      %s85 = sadd.s32 %s84, 1
      %s86 = scalar_select %p83, %s84, %s85
      %p89 = pneg %p83
      %p90 = scmp.eq.s32.totalorder %s13, 1
      %p91 = por %p89, %p90
      %p92 = scmp.ne.s32.totalorder %s84, %s87
      %p93 = scmp.eq.s32.totalorder %s13, 0
      %p94 = por %p92, %p93
      %p95 = scmp.ne.s32.totalorder %s84, %s87
      %p96 = scmp.eq.s32.totalorder %s18, 1
      %p97 = por %p95, %p96
      %p98 = scmp.ne.s32.totalorder %s87, %s88
      %p99 = scmp.eq.s32.totalorder %s18, 0
      %p100 = por %p98, %p99
      %p101 = scmp.ne.s32.totalorder %s87, %s88
      %p102 = scmp.eq.s32.totalorder %s19, 1
      %p103 = por %p101, %p102
      %p105 = scmp.ne.s32.totalorder %s88, %s104
      %p106 = scmp.eq.s32.totalorder %s19, 0
      %p107 = por %p105, %p106
      %s108 = ssub.s32 %s20, %s32
      %s109 = ssub.s32 %s21, %s28
      %s110 = sor.u32 %s108, %s109
      %p111 = scmp.eq.s32.totalorder %s110, 0
      %s113 = sadd.s32 %s112, 1
      %s114 = scalar_select %p111, %s112, %s113
      %p117 = pneg %p111
      %p118 = scmp.eq.s32.totalorder %s13, 1
      %p119 = por %p117, %p118
      %p120 = scmp.ne.s32.totalorder %s112, %s115
      %p121 = scmp.eq.s32.totalorder %s13, 0
      %p122 = por %p120, %p121
      %p123 = scmp.ne.s32.totalorder %s112, %s115
      %p124 = scmp.eq.s32.totalorder %s18, 1
      %p125 = por %p123, %p124
      %p126 = scmp.ne.s32.totalorder %s115, %s116
      %p127 = scmp.eq.s32.totalorder %s18, 0
      %p128 = por %p126, %p127
      %p129 = scmp.ne.s32.totalorder %s115, %s116
      %p130 = scmp.eq.s32.totalorder %s19, 1
      %p131 = por %p129, %p130
      %p133 = scmp.ne.s32.totalorder %s116, %s132
      %p134 = scmp.eq.s32.totalorder %s19, 0
      %p135 = por %p133, %p134
      %p136 = scmp.le.s32.totalorder 1, %s13
      %p137 = scmp.lt.s32.totalorder %s13, 3
      %p138 = pnand %p136, %p137
      %p139 = pneg %p138
      // Predicated region
      $region9: #{stacked_masked_self_attention.1} parent=5 // pred_check
        _
      $region10: #{stacked_masked_self_attention.1} parent=5 // pred_check_branch
        %141 = sbr.rel (%p138) target = $region12
      $region11: #{stacked_masked_self_attention.1} parent=5 // pred_region
        %s142 = ssub.s32 %s13, 1
        // Predicated region
        $region13: #{stacked_masked_self_attention.1} parent=11 // pred_check
          %p143 = pneg %p72
        $region14: #{stacked_masked_self_attention.1} parent=11 // pred_check_branch
          %145 = sbr.rel (%p143) target = $region16
        $region15: #{stacked_masked_self_attention.1} parent=11 // pred_region
          _
        $region16: #{stacked_masked_self_attention.1} parent=11 // pred_fallthru
          _
      $region12: #{stacked_masked_self_attention.1} parent=5 // pred_fallthru
        _
      %p146 = scmp.lt.s32.totalorder %s13, 2
      // Predicated region
      $region17: #{stacked_masked_self_attention.1} parent=5 // pred_check
        %p147 = pneg %p146
      $region18: #{stacked_masked_self_attention.1} parent=5 // pred_check_branch
        %149 = sbr.rel (%p147) target = $region20
      $region19: #{stacked_masked_self_attention.1} parent=5 // pred_region
        // Predicated region
        $region21: #{stacked_masked_self_attention.1} parent=19 // pred_check
          %p150 = pneg %p45
        $region22: #{stacked_masked_self_attention.1} parent=19 // pred_check_branch
          %152 = sbr.rel (%p150) target = $region24
        $region23: #{stacked_masked_self_attention.1} parent=19 // pred_region
          %p153 = scmp.lt.s32.totalorder %s20, 1
          %s154 = scalar_select %p153, %s20, 1
          %s155 = smul.addr %s154, 8
          %s156 = scalar_lea.vmem %s0, %s155
        $region24: #{stacked_masked_self_attention.1} parent=19 // pred_fallthru
          _
      $region20: #{stacked_masked_self_attention.1} parent=5 // pred_fallthru
        _
      %p157 = scmp.le.s32.totalorder 1, %s13
      %p158 = scmp.lt.s32.totalorder %s13, 3
      %p159 = pnand %p157, %p158
      %p160 = pneg %p159
      // Predicated region
      $region25: #{stacked_masked_self_attention.1} parent=5 // pred_check
        _
      $region26: #{stacked_masked_self_attention.1} parent=5 // pred_check_branch
        %162 = sbr.rel (%p159) target = $region28
      $region27: #{stacked_masked_self_attention.1} parent=5 // pred_region
        %s163 = ssub.s32 %s13, 1
        %p164 = scmp.lt.s32.totalorder %s22, 1
        %s165 = scalar_select %p164, %s22, 1
        %s166 = smul.addr %s165, 8
        %s167 = scalar_lea.vmem %s0, %s166
        %p168 = pneg %p51
        %p169 = pneg %p48
        %p170 = pneg %p72
        %p171 = pneg %p69
        %p172 = pneg %p100
        %p173 = pneg %p97
        %p174 = scmp.lt.s32.totalorder %s22, 1
        %s175 = scalar_select %p174, %s22, 1
        %p176 = scmp.lt.s32.totalorder %s23, 0
        %s177 = scalar_select %p176, %s23, 0
        %s178 = sadd.s32 %s177, %s175
        %s179 = smul.addr %s178, 8
        %s180 = scalar_lea.vmem %s2, %s179
        %p181 = pneg %p128
        %p182 = pneg %p125
        %s183 = sand.u32 %s115, 1
        %s184 = scalar_lea.sflag [#allocation4], %s183
        %s185 = sand.u32 %s115, 1
        %s186 = smul.addr %s185, 32
        %s187 = scalar_lea.vmem [#allocation3], %s186
        %p188 = scmp.lt.s32.totalorder %s22, 1
        %s189 = scalar_select %p188, %s22, 1
        %s190 = smul.addr %s189, 8
        %s191 = scalar_lea.vmem %s0, %s190
        %p192 = scmp.lt.s32.totalorder %s22, 1
        %s193 = scalar_select %p192, %s22, 1
        %p194 = scmp.lt.s32.totalorder %s23, 0
        %s195 = scalar_select %p194, %s23, 0
        %s196 = sadd.s32 %s195, %s193
        %s197 = smul.addr %s196, 8
        %s198 = scalar_lea.vmem %s2, %s197
        %p199 = scmp.eq.s32.totalorder %s23, 0
        // Predicated region
        $region29: #{stacked_masked_self_attention.1} parent=27 // pred_check
          %p200 = pneg %p199
        $region30: #{stacked_masked_self_attention.1} parent=27 // pred_check_branch
          %202 = sbr.rel (%p200) target = $region32
        $region31: #{stacked_masked_self_attention.1} parent=27 // pred_region
          %v203 = vld [vmem:[%s191] sm:$0xff]
          %v204 = vld [vmem:[%s1] sm:$0xff]
          %v205 = vld [vmem:[%s1 + $0x8] sm:$0xff]
          %v206 = vld [vmem:[%s1 + $0x10] sm:$0xff]
          %v207 = vld [vmem:[%s1 + $0x18] sm:$0xff]
          %v208 = vld [vmem:[%s1 + $0x20] sm:$0xff]
          %v209 = vld [vmem:[%s1 + $0x28] sm:$0xff]
          %v210 = vld [vmem:[%s1 + $0x30] sm:$0xff]
          %v211 = vld [vmem:[%s1 + $0x38] sm:$0xff]
          %v212 = vld [vmem:[%s1 + $0x40] sm:$0xff]
          %v213 = vld [vmem:[%s1 + $0x48] sm:$0xff]
          %v214 = vld [vmem:[%s1 + $0x50] sm:$0xff]
          %v215 = vld [vmem:[%s1 + $0x58] sm:$0xff]
          %vm216 = vcmask 261120
          %v218 = vsel %vm216, %v203, 0
          %220 = vmatprep.subr.mxu0 %v205
          %221 = vmatpush1.msra.mxu0 %v204
          %222 = vmatprep.subr.mxu0 %v208
          %223 = vmatpush1.msra.mxu0 %v207
          %224 = vmatprep.subr.mxu0 %v211
          %225 = vmatpush1.msra.mxu0 %v210
          %226 = vmatprep.subr.mxu0 %v214
          %227 = vmatpush1.msra.mxu0 %v213
          %228 = vmatprep.subr.mxu0 0.0
          %229 = vmatpush1.msra.mxu0 0.0
          %230 = vmatprep.subr.mxu0 0.0
          %231 = vmatpush1.msra.mxu0 0.0
          %232 = vmatprep.subr.mxu0 0.0
          %233 = vmatpush1.msra.mxu0 0.0
          %234 = vmatprep.subr.mxu0 0.0
          %235 = vmatpush1.msra.mxu0 0.0
          %236 = vmatprep.subr.mxu0 0.0
          %237 = vmatpush1.msra.mxu0 0.0
          %238 = vmatprep.subr.mxu0 0.0
          %239 = vmatpush1.msra.mxu0 0.0
          %240 = vmatprep.subr.mxu0 0.0
          %241 = vmatpush1.msra.mxu0 0.0
          %242 = vmatprep.subr.mxu0 0.0
          %243 = vmatpush1.msra.mxu0 0.0
          %244 = vmatprep.subr.mxu0 0.0
          %245 = vmatpush1.msra.mxu0 0.0
          %246 = vmatprep.subr.mxu0 0.0
          %247 = vmatpush1.msra.mxu0 0.0
          %248 = vmatprep.subr.mxu0 0.0
          %249 = vmatpush1.msra.mxu0 0.0
          %250 = vmatprep.subr.mxu0 0.0
          %251 = vmatpush1.msra.mxu0 0.0
          %252 = vmatprep.subr.mxu0 0.0
          %253 = vmatpush1.msra.mxu0 0.0
          %254 = vmatprep.subr.mxu0 0.0
          %255 = vmatpush1.msra.mxu0 0.0
          %256 = vmatprep.subr.mxu0 0.0
          %257 = vmatpush1.msra.mxu0 0.0
          %258 = vmatprep.subr.mxu0 0.0
          %259 = vmatpush1.msra.mxu0 0.0
          %260 = vmatprep.subr.mxu0 0.0
          %261 = vmatpush1.msra.mxu0 0.0
          %262 = vmatprep.subr.mxu0 0.0
          %263 = vmatpush1.msra.mxu0 0.0
          %264 = vmatprep.subr.mxu0 0.0
          %265 = vmatpush1.msra.mxu0 0.0
          %266 = vmatprep.subr.mxu0 0.0
          %267 = vmatpush1.msra.mxu0 0.0
          %268 = vmatprep.subr.mxu0 0.0
          %269 = vmatpush1.msra.mxu0 0.0
          %270 = vmatprep.subr.mxu0 0.0
          %271 = vmatpush1.msra.mxu0 0.0
          %272 = vmatprep.subr.mxu0 0.0
          %273 = vmatpush1.msra.mxu0 0.0
          %274 = vmatprep.subr.mxu0 0.0
          %275 = vmatpush1.msra.mxu0 0.0
          %276 = vmatprep.subr.mxu0 0.0
          %277 = vmatpush1.msra.mxu0 0.0
          %278 = vmatprep.subr.mxu0 0.0
          %279 = vmatpush1.msra.mxu0 0.0
          %280 = vmatprep.subr.mxu0 0.0
          %281 = vmatpush1.msra.mxu0 0.0
          %282 = vmatprep.subr.mxu0 0.0
          %283 = vmatpush1.msra.mxu0 0.0
          %284 = vmatprep.mubr.f32.mxu0 0.0
          %285 = vmatmul.mubr.f32.gmra.mrb[0].mxu0 %v218
          %v286 = vpop.f32.mrb[0].mxu0
          %v287 = vadd.f32 0.0, %v286
          %v288 = vpop.f32.mrb[0].mxu0
          %v289 = vadd.f32 0.0, %v288
          %290 = vdwg.mxu0
          %291 = vmatprep.subr.mxu0 0.0
          %292 = vmatpush1.msra.mxu0 %v206
          %293 = vmatprep.subr.mxu0 0.0
          %294 = vmatpush1.msra.mxu0 %v209
          %295 = vmatprep.subr.mxu0 0.0
          %296 = vmatpush1.msra.mxu0 %v212
          %297 = vmatprep.subr.mxu0 0.0
          %298 = vmatpush1.msra.mxu0 %v215
          %299 = vmatprep.subr.mxu0 0.0
          %300 = vmatpush1.msra.mxu0 0.0
          %301 = vmatprep.subr.mxu0 0.0
          %302 = vmatpush1.msra.mxu0 0.0
          %303 = vmatprep.subr.mxu0 0.0
          %304 = vmatpush1.msra.mxu0 0.0
          %305 = vmatprep.subr.mxu0 0.0
          %306 = vmatpush1.msra.mxu0 0.0
          %307 = vmatprep.subr.mxu0 0.0
          %308 = vmatpush1.msra.mxu0 0.0
          %309 = vmatprep.subr.mxu0 0.0
          %310 = vmatpush1.msra.mxu0 0.0
          %311 = vmatprep.subr.mxu0 0.0
          %312 = vmatpush1.msra.mxu0 0.0
          %313 = vmatprep.subr.mxu0 0.0
          %314 = vmatpush1.msra.mxu0 0.0
          %315 = vmatprep.subr.mxu0 0.0
          %316 = vmatpush1.msra.mxu0 0.0
          %317 = vmatprep.subr.mxu0 0.0
          %318 = vmatpush1.msra.mxu0 0.0
          %319 = vmatprep.subr.mxu0 0.0
          %320 = vmatpush1.msra.mxu0 0.0
          %321 = vmatprep.subr.mxu0 0.0
          %322 = vmatpush1.msra.mxu0 0.0
          %323 = vmatprep.subr.mxu0 0.0
          %324 = vmatpush1.msra.mxu0 0.0
          %325 = vmatprep.subr.mxu0 0.0
          %326 = vmatpush1.msra.mxu0 0.0
          %327 = vmatprep.subr.mxu0 0.0
          %328 = vmatpush1.msra.mxu0 0.0
          %329 = vmatprep.subr.mxu0 0.0
          %330 = vmatpush1.msra.mxu0 0.0
          %331 = vmatprep.subr.mxu0 0.0
          %332 = vmatpush1.msra.mxu0 0.0
          %333 = vmatprep.subr.mxu0 0.0
          %334 = vmatpush1.msra.mxu0 0.0
          %335 = vmatprep.subr.mxu0 0.0
          %336 = vmatpush1.msra.mxu0 0.0
          %337 = vmatprep.subr.mxu0 0.0
          %338 = vmatpush1.msra.mxu0 0.0
          %339 = vmatprep.subr.mxu0 0.0
          %340 = vmatpush1.msra.mxu0 0.0
          %341 = vmatprep.subr.mxu0 0.0
          %342 = vmatpush1.msra.mxu0 0.0
          %343 = vmatprep.subr.mxu0 0.0
          %344 = vmatpush1.msra.mxu0 0.0
          %345 = vmatprep.subr.mxu0 0.0
          %346 = vmatpush1.msra.mxu0 0.0
          %347 = vmatprep.subr.mxu0 0.0
          %348 = vmatpush1.msra.mxu0 0.0
          %349 = vmatprep.subr.mxu0 0.0
          %350 = vmatpush1.msra.mxu0 0.0
          %351 = vmatprep.subr.mxu0 0.0
          %352 = vmatpush1.msra.mxu0 0.0
          %353 = vmatprep.subr.mxu0 0.0
          %354 = vmatpush1.msra.mxu0 0.0
          %355 = vmatprep.mubr.f32.mxu0 0.0
          %356 = vmatmul.mubr.f32.gmra.mrb[0].mxu0 %v218
          %v357 = vpop.f32.mrb[0].mxu0
          %v358 = vadd.f32 0.0, %v357
          %v359 = vpop.f32.mrb[0].mxu0
          %360 = vdwg.mxu0
          %361 = vst [vmem:[#allocation2] sm:$0xff] %v287
          %362 = vst [vmem:[#allocation2 + $0x8] sm:$0xff] %v289
          %363 = vst [vmem:[#allocation2 + $0x10] sm:$0xff] %v358
        $region32: #{stacked_masked_self_attention.1} parent=27 // pred_fallthru
          _
        %s364 = smul.u32 %s23, 8
        %s365 = sshra.s32 %s364, 3
        %s366 = sand.u32 %s364, 7
        %s367 = smul.u32 %s365, 3
        %s368 = smul.addr %s367, 8
        %s369 = scalar_lea.vmem [#allocation2], %s368
        %v370 = vld [vmem:[%s369] sm:$0xff]
        %v371 = vmul.f32 %v370, 0.17677669
        %v372 = vlaneseq
        %v373 = vshrl.u32 %v372, 7
        %v374 = vstv %s364
        %v375 = vadd.s32 %v373, %v374
        %v376 = vlaneseq
        %v377 = vand.u32 %v376, 127
        %vm378 = vcmp.le.s32.totalorder %v377, %v375
        %v379 = vld [vmem:[#allocation2 + $0x8] sm:$0xff]
        %v380 = vld [vmem:[#allocation2 + $0x10] sm:$0xff]
        %vm381 = vcmask 261120
        %v383 = vsel %vm381, %v371, 0
        %v386 = vsel %vm381, %v379, 0
        %388 = vmatprep.subr.mxu0 0.0
        %389 = vmatpush1.xpose.msra.mxu0 %v386
        %390 = vmatprep.subr.mxu0 0.0
        %391 = vmatpush1.xpose.msra.mxu0 0.0
        %392 = vmatprep.subr.mxu0 0.0
        %393 = vmatpush1.xpose.msra.mxu0 0.0
        %394 = vmatprep.subr.mxu0 0.0
        %395 = vmatpush1.xpose.msra.mxu0 0.0
        %396 = vmatprep.subr.mxu0 0.0
        %397 = vmatpush1.xpose.msra.mxu0 0.0
        %398 = vmatprep.subr.mxu0 0.0
        %399 = vmatpush1.xpose.msra.mxu0 0.0
        %400 = vmatprep.subr.mxu0 0.0
        %401 = vmatpush1.xpose.msra.mxu0 0.0
        %402 = vmatprep.subr.mxu0 0.0
        %403 = vmatpush1.xpose.msra.mxu0 0.0
        %404 = vmatprep.subr.mxu0 0.0
        %405 = vmatpush1.xpose.msra.mxu0 0.0
        %406 = vmatprep.subr.mxu0 0.0
        %407 = vmatpush1.xpose.msra.mxu0 0.0
        %408 = vmatprep.subr.mxu0 0.0
        %409 = vmatpush1.xpose.msra.mxu0 0.0
        %410 = vmatprep.subr.mxu0 0.0
        %411 = vmatpush1.xpose.msra.mxu0 0.0
        %412 = vmatprep.subr.mxu0 0.0
        %413 = vmatpush1.xpose.msra.mxu0 0.0
        %414 = vmatprep.subr.mxu0 0.0
        %415 = vmatpush1.xpose.msra.mxu0 0.0
        %416 = vmatprep.subr.mxu0 0.0
        %417 = vmatpush1.xpose.msra.mxu0 0.0
        %418 = vmatprep.subr.mxu0 0.0
        %419 = vmatpush1.xpose.msra.mxu0 0.0
        %420 = vmatprep.subr.mxu0 0.0
        %421 = vmatpush1.xpose.msra.mxu0 0.0
        %422 = vmatprep.subr.mxu0 0.0
        %423 = vmatpush1.xpose.msra.mxu0 0.0
        %424 = vmatprep.subr.mxu0 0.0
        %425 = vmatpush1.xpose.msra.mxu0 0.0
        %426 = vmatprep.subr.mxu0 0.0
        %427 = vmatpush1.xpose.msra.mxu0 0.0
        %428 = vmatprep.subr.mxu0 0.0
        %429 = vmatpush1.xpose.msra.mxu0 0.0
        %430 = vmatprep.subr.mxu0 0.0
        %431 = vmatpush1.xpose.msra.mxu0 0.0
        %432 = vmatprep.subr.mxu0 0.0
        %433 = vmatpush1.xpose.msra.mxu0 0.0
        %434 = vmatprep.subr.mxu0 0.0
        %435 = vmatpush1.xpose.msra.mxu0 0.0
        %436 = vmatprep.subr.mxu0 0.0
        %437 = vmatpush1.xpose.msra.mxu0 0.0
        %438 = vmatprep.subr.mxu0 0.0
        %439 = vmatpush1.xpose.msra.mxu0 0.0
        %440 = vmatprep.subr.mxu0 0.0
        %441 = vmatpush1.xpose.msra.mxu0 0.0
        %442 = vmatprep.subr.mxu0 0.0
        %443 = vmatpush1.xpose.msra.mxu0 0.0
        %444 = vmatprep.subr.mxu0 0.0
        %445 = vmatpush1.xpose.msra.mxu0 0.0
        %446 = vmatprep.subr.mxu0 0.0
        %447 = vmatpush1.xpose.msra.mxu0 0.0
        %448 = vmatprep.subr.mxu0 0.0
        %449 = vmatpush1.xpose.msra.mxu0 0.0
        %450 = vmatprep.subr.mxu0 0.0
        %451 = vmatpush1.xpose.msra.mxu0 0.0
        %452 = vmatprep.mubr.f32.mxu0 0.0
        %453 = vmatmul.mubr.f32.gmra.mrb[0].mxu0 %v383
        %v454 = vpop.f32.mrb[0].mxu0
        %v455 = vadd.f32 0.0, %v454
        %v456 = vpop.f32.mrb[0].mxu0
        %457 = vdwg.mxu0
        %v458 = vsel %vm378, %v455, -1e+30
        %vm459 = vcmask 64512
        %v460 = vsel %vm459, %v458, -inf
        %461 = vmax.xlane.f32.xlu0 %v460
        %v462 = vpop.xlane.xlu0 %461
        %v463 = vsub.f32 %v458, %v462
        %v464 = vmul.f32 %v463, 1.442695
        %v465 = vpow.pop %v464
        %v466 = vsel %vm459, %v465, 0.0
        %467 = vadd.xlane.f32.xlu0 %v466
        %v468 = vpop.xlane.xlu0 %467
        %v469 = vrcp.pop %v468
        %v470 = vmul.f32 %v465, %v469
        %471 = vst.msk [vmem:[%s187] sm:$0xff] %vm459, %v470
        %v473 = vsel %vm459, %v470, 0
        %475 = vmatprep.subr.mxu0 0.0
        %476 = vmatpush1.msra.mxu0 %v380
        %477 = vmatprep.subr.mxu0 0.0
        %478 = vmatpush1.msra.mxu0 0.0
        %479 = vmatprep.subr.mxu0 0.0
        %480 = vmatpush1.msra.mxu0 0.0
        %481 = vmatprep.subr.mxu0 0.0
        %482 = vmatpush1.msra.mxu0 0.0
        %483 = vmatprep.subr.mxu0 0.0
        %484 = vmatpush1.msra.mxu0 0.0
        %485 = vmatprep.subr.mxu0 0.0
        %486 = vmatpush1.msra.mxu0 0.0
        %487 = vmatprep.subr.mxu0 0.0
        %488 = vmatpush1.msra.mxu0 0.0
        %489 = vmatprep.subr.mxu0 0.0
        %490 = vmatpush1.msra.mxu0 0.0
        %491 = vmatprep.subr.mxu0 0.0
        %492 = vmatpush1.msra.mxu0 0.0
        %493 = vmatprep.subr.mxu0 0.0
        %494 = vmatpush1.msra.mxu0 0.0
        %495 = vmatprep.subr.mxu0 0.0
        %496 = vmatpush1.msra.mxu0 0.0
        %497 = vmatprep.subr.mxu0 0.0
        %498 = vmatpush1.msra.mxu0 0.0
        %499 = vmatprep.subr.mxu0 0.0
        %500 = vmatpush1.msra.mxu0 0.0
        %501 = vmatprep.subr.mxu0 0.0
        %502 = vmatpush1.msra.mxu0 0.0
        %503 = vmatprep.subr.mxu0 0.0
        %504 = vmatpush1.msra.mxu0 0.0
        %505 = vmatprep.subr.mxu0 0.0
        %506 = vmatpush1.msra.mxu0 0.0
        %507 = vmatprep.subr.mxu0 0.0
        %508 = vmatpush1.msra.mxu0 0.0
        %509 = vmatprep.subr.mxu0 0.0
        %510 = vmatpush1.msra.mxu0 0.0
        %511 = vmatprep.subr.mxu0 0.0
        %512 = vmatpush1.msra.mxu0 0.0
        %513 = vmatprep.subr.mxu0 0.0
        %514 = vmatpush1.msra.mxu0 0.0
        %515 = vmatprep.subr.mxu0 0.0
        %516 = vmatpush1.msra.mxu0 0.0
        %517 = vmatprep.subr.mxu0 0.0
        %518 = vmatpush1.msra.mxu0 0.0
        %519 = vmatprep.subr.mxu0 0.0
        %520 = vmatpush1.msra.mxu0 0.0
        %521 = vmatprep.subr.mxu0 0.0
        %522 = vmatpush1.msra.mxu0 0.0
        %523 = vmatprep.subr.mxu0 0.0
        %524 = vmatpush1.msra.mxu0 0.0
        %525 = vmatprep.subr.mxu0 0.0
        %526 = vmatpush1.msra.mxu0 0.0
        %527 = vmatprep.subr.mxu0 0.0
        %528 = vmatpush1.msra.mxu0 0.0
        %529 = vmatprep.subr.mxu0 0.0
        %530 = vmatpush1.msra.mxu0 0.0
        %531 = vmatprep.subr.mxu0 0.0
        %532 = vmatpush1.msra.mxu0 0.0
        %533 = vmatprep.subr.mxu0 0.0
        %534 = vmatpush1.msra.mxu0 0.0
        %535 = vmatprep.subr.mxu0 0.0
        %536 = vmatpush1.msra.mxu0 0.0
        %537 = vmatprep.subr.mxu0 0.0
        %538 = vmatpush1.msra.mxu0 0.0
        %539 = vmatprep.mubr.f32.mxu0 0.0
        %540 = vmatmul.mubr.f32.gmra.mrb[0].mxu0 %v473
        %v541 = vpop.f32.mrb[0].mxu0
        %v542 = vadd.f32 0.0, %v541
        %v543 = vpop.f32.mrb[0].mxu0
        %544 = vdwg.mxu0
        %545 = vst.msk [vmem:[%s198] sm:$0xff] %vm381, %v542
        %v546 = vld [vmem:[#allocation2 + $0x8] sm:$0xff]
        %v547 = vld [vmem:[#allocation2 + $0x10] sm:$0xff]
        %548 = vrot.lane.b32.xlu0 %v371, 96
        %v549 = vpop.permute.xlu0 %548
        %551 = vrot.lane.b32.xlu0 %v546, 96
        %v552 = vpop.permute.xlu0 %551
        %v553 = vsel %vm381, %v549, 0
        %v555 = vsel %vm381, %v552, 0
        %557 = vmatprep.subr.mxu0 0.0
        %558 = vmatpush1.xpose.msra.mxu0 %v555
        %559 = vmatprep.subr.mxu0 0.0
        %560 = vmatpush1.xpose.msra.mxu0 0.0
        %561 = vmatprep.subr.mxu0 0.0
        %562 = vmatpush1.xpose.msra.mxu0 0.0
        %563 = vmatprep.subr.mxu0 0.0
        %564 = vmatpush1.xpose.msra.mxu0 0.0
        %565 = vmatprep.subr.mxu0 0.0
        %566 = vmatpush1.xpose.msra.mxu0 0.0
        %567 = vmatprep.subr.mxu0 0.0
        %568 = vmatpush1.xpose.msra.mxu0 0.0
        %569 = vmatprep.subr.mxu0 0.0
        %570 = vmatpush1.xpose.msra.mxu0 0.0
        %571 = vmatprep.subr.mxu0 0.0
        %572 = vmatpush1.xpose.msra.mxu0 0.0
        %573 = vmatprep.subr.mxu0 0.0
        %574 = vmatpush1.xpose.msra.mxu0 0.0
        %575 = vmatprep.subr.mxu0 0.0
        %576 = vmatpush1.xpose.msra.mxu0 0.0
        %577 = vmatprep.subr.mxu0 0.0
        %578 = vmatpush1.xpose.msra.mxu0 0.0
        %579 = vmatprep.subr.mxu0 0.0
        %580 = vmatpush1.xpose.msra.mxu0 0.0
        %581 = vmatprep.subr.mxu0 0.0
        %582 = vmatpush1.xpose.msra.mxu0 0.0
        %583 = vmatprep.subr.mxu0 0.0
        %584 = vmatpush1.xpose.msra.mxu0 0.0
        %585 = vmatprep.subr.mxu0 0.0
        %586 = vmatpush1.xpose.msra.mxu0 0.0
        %587 = vmatprep.subr.mxu0 0.0
        %588 = vmatpush1.xpose.msra.mxu0 0.0
        %589 = vmatprep.subr.mxu0 0.0
        %590 = vmatpush1.xpose.msra.mxu0 0.0
        %591 = vmatprep.subr.mxu0 0.0
        %592 = vmatpush1.xpose.msra.mxu0 0.0
        %593 = vmatprep.subr.mxu0 0.0
        %594 = vmatpush1.xpose.msra.mxu0 0.0
        %595 = vmatprep.subr.mxu0 0.0
        %596 = vmatpush1.xpose.msra.mxu0 0.0
        %597 = vmatprep.subr.mxu0 0.0
        %598 = vmatpush1.xpose.msra.mxu0 0.0
        %599 = vmatprep.subr.mxu0 0.0
        %600 = vmatpush1.xpose.msra.mxu0 0.0
        %601 = vmatprep.subr.mxu0 0.0
        %602 = vmatpush1.xpose.msra.mxu0 0.0
        %603 = vmatprep.subr.mxu0 0.0
        %604 = vmatpush1.xpose.msra.mxu0 0.0
        %605 = vmatprep.subr.mxu0 0.0
        %606 = vmatpush1.xpose.msra.mxu0 0.0
        %607 = vmatprep.subr.mxu0 0.0
        %608 = vmatpush1.xpose.msra.mxu0 0.0
        %609 = vmatprep.subr.mxu0 0.0
        %610 = vmatpush1.xpose.msra.mxu0 0.0
        %611 = vmatprep.subr.mxu0 0.0
        %612 = vmatpush1.xpose.msra.mxu0 0.0
        %613 = vmatprep.subr.mxu0 0.0
        %614 = vmatpush1.xpose.msra.mxu0 0.0
        %615 = vmatprep.subr.mxu0 0.0
        %616 = vmatpush1.xpose.msra.mxu0 0.0
        %617 = vmatprep.subr.mxu0 0.0
        %618 = vmatpush1.xpose.msra.mxu0 0.0
        %619 = vmatprep.subr.mxu0 0.0
        %620 = vmatpush1.xpose.msra.mxu0 0.0
        %621 = vmatprep.mubr.f32.mxu0 0.0
        %622 = vmatmul.mubr.f32.gmra.mrb[0].mxu0 %v553
        %v623 = vpop.f32.mrb[0].mxu0
        %v624 = vadd.f32 0.0, %v623
        %v625 = vpop.f32.mrb[0].mxu0
        %626 = vdwg.mxu0
        %v627 = vsel %vm378, %v624, -1e+30
        %v628 = vsel %vm459, %v627, -inf
        %629 = vmax.xlane.f32.xlu0 %v628
        %v630 = vpop.xlane.xlu0 %629
        %v631 = vsub.f32 %v627, %v630
        %v632 = vmul.f32 %v631, 1.442695
        %v633 = vpow.pop %v632
        %v634 = vsel %vm459, %v633, 0.0
        %635 = vadd.xlane.f32.xlu0 %v634
        %v636 = vpop.xlane.xlu0 %635
        %v637 = vrcp.pop %v636
        %v638 = vmul.f32 %v633, %v637
        %s639 = scalar_lea.vmem %s187, 8 [#allocation3]
        %640 = vst.msk [vmem:[%s639] sm:$0xff] %vm459, %v638
        %642 = vrot.lane.b32.xlu0 %v547, 96
        %v643 = vpop.permute.xlu0 %642
        %v646 = vsel %vm459, %v638, 0
        %648 = vmatprep.subr.mxu0 0.0
        %649 = vmatpush1.msra.mxu0 %v643
        %650 = vmatprep.subr.mxu0 0.0
        %651 = vmatpush1.msra.mxu0 0.0
        %652 = vmatprep.subr.mxu0 0.0
        %653 = vmatpush1.msra.mxu0 0.0
        %654 = vmatprep.subr.mxu0 0.0
        %655 = vmatpush1.msra.mxu0 0.0
        %656 = vmatprep.subr.mxu0 0.0
        %657 = vmatpush1.msra.mxu0 0.0
        %658 = vmatprep.subr.mxu0 0.0
        %659 = vmatpush1.msra.mxu0 0.0
        %660 = vmatprep.subr.mxu0 0.0
        %661 = vmatpush1.msra.mxu0 0.0
        %662 = vmatprep.subr.mxu0 0.0
        %663 = vmatpush1.msra.mxu0 0.0
        %664 = vmatprep.subr.mxu0 0.0
        %665 = vmatpush1.msra.mxu0 0.0
        %666 = vmatprep.subr.mxu0 0.0
        %667 = vmatpush1.msra.mxu0 0.0
        %668 = vmatprep.subr.mxu0 0.0
        %669 = vmatpush1.msra.mxu0 0.0
        %670 = vmatprep.subr.mxu0 0.0
        %671 = vmatpush1.msra.mxu0 0.0
        %672 = vmatprep.subr.mxu0 0.0
        %673 = vmatpush1.msra.mxu0 0.0
        %674 = vmatprep.subr.mxu0 0.0
        %675 = vmatpush1.msra.mxu0 0.0
        %676 = vmatprep.subr.mxu0 0.0
        %677 = vmatpush1.msra.mxu0 0.0
        %678 = vmatprep.subr.mxu0 0.0
        %679 = vmatpush1.msra.mxu0 0.0
        %680 = vmatprep.subr.mxu0 0.0
        %681 = vmatpush1.msra.mxu0 0.0
        %682 = vmatprep.subr.mxu0 0.0
        %683 = vmatpush1.msra.mxu0 0.0
        %684 = vmatprep.subr.mxu0 0.0
        %685 = vmatpush1.msra.mxu0 0.0
        %686 = vmatprep.subr.mxu0 0.0
        %687 = vmatpush1.msra.mxu0 0.0
        %688 = vmatprep.subr.mxu0 0.0
        %689 = vmatpush1.msra.mxu0 0.0
        %690 = vmatprep.subr.mxu0 0.0
        %691 = vmatpush1.msra.mxu0 0.0
        %692 = vmatprep.subr.mxu0 0.0
        %693 = vmatpush1.msra.mxu0 0.0
        %694 = vmatprep.subr.mxu0 0.0
        %695 = vmatpush1.msra.mxu0 0.0
        %696 = vmatprep.subr.mxu0 0.0
        %697 = vmatpush1.msra.mxu0 0.0
        %698 = vmatprep.subr.mxu0 0.0
        %699 = vmatpush1.msra.mxu0 0.0
        %700 = vmatprep.subr.mxu0 0.0
        %701 = vmatpush1.msra.mxu0 0.0
        %702 = vmatprep.subr.mxu0 0.0
        %703 = vmatpush1.msra.mxu0 0.0
        %704 = vmatprep.subr.mxu0 0.0
        %705 = vmatpush1.msra.mxu0 0.0
        %706 = vmatprep.subr.mxu0 0.0
        %707 = vmatpush1.msra.mxu0 0.0
        %708 = vmatprep.subr.mxu0 0.0
        %709 = vmatpush1.msra.mxu0 0.0
        %710 = vmatprep.subr.mxu0 0.0
        %711 = vmatpush1.msra.mxu0 0.0
        %712 = vmatprep.mubr.f32.mxu0 0.0
        %713 = vmatmul.mubr.f32.gmra.mrb[0].mxu0 %v646
        %v714 = vpop.f32.mrb[0].mxu0
        %v715 = vadd.f32 0.0, %v714
        %v716 = vpop.f32.mrb[0].mxu0
        %717 = vdwg.mxu0
        %719 = vrot.lane.b32.xlu0 %v715, 32
        %v720 = vpop.permute.xlu0 %719
        %vm722 = vcmask 523520
        %723 = vst.msk [vmem:[%s198] sm:$0xff] %vm722, %v720
        %v724 = vld [vmem:[#allocation2 + $0x8] sm:$0xff]
        %v725 = vld [vmem:[#allocation2 + $0x10] sm:$0xff]
        %726 = vrot.lane.b32.xlu0 %v371, 64
        %v727 = vpop.permute.xlu0 %726
        %729 = vrot.lane.b32.xlu0 %v724, 64
        %v730 = vpop.permute.xlu0 %729
        %v731 = vsel %vm381, %v727, 0
        %v733 = vsel %vm381, %v730, 0
        %735 = vmatprep.subr.mxu0 0.0
        %736 = vmatpush1.xpose.msra.mxu0 %v733
        %737 = vmatprep.subr.mxu0 0.0
        %738 = vmatpush1.xpose.msra.mxu0 0.0
        %739 = vmatprep.subr.mxu0 0.0
        %740 = vmatpush1.xpose.msra.mxu0 0.0
        %741 = vmatprep.subr.mxu0 0.0
        %742 = vmatpush1.xpose.msra.mxu0 0.0
        %743 = vmatprep.subr.mxu0 0.0
        %744 = vmatpush1.xpose.msra.mxu0 0.0
        %745 = vmatprep.subr.mxu0 0.0
        %746 = vmatpush1.xpose.msra.mxu0 0.0
        %747 = vmatprep.subr.mxu0 0.0
        %748 = vmatpush1.xpose.msra.mxu0 0.0
        %749 = vmatprep.subr.mxu0 0.0
        %750 = vmatpush1.xpose.msra.mxu0 0.0
        %751 = vmatprep.subr.mxu0 0.0
        %752 = vmatpush1.xpose.msra.mxu0 0.0
        %753 = vmatprep.subr.mxu0 0.0
        %754 = vmatpush1.xpose.msra.mxu0 0.0
        %755 = vmatprep.subr.mxu0 0.0
        %756 = vmatpush1.xpose.msra.mxu0 0.0
        %757 = vmatprep.subr.mxu0 0.0
        %758 = vmatpush1.xpose.msra.mxu0 0.0
        %759 = vmatprep.subr.mxu0 0.0
        %760 = vmatpush1.xpose.msra.mxu0 0.0
        %761 = vmatprep.subr.mxu0 0.0
        %762 = vmatpush1.xpose.msra.mxu0 0.0
        %763 = vmatprep.subr.mxu0 0.0
        %764 = vmatpush1.xpose.msra.mxu0 0.0
        %765 = vmatprep.subr.mxu0 0.0
        %766 = vmatpush1.xpose.msra.mxu0 0.0
        %767 = vmatprep.subr.mxu0 0.0
        %768 = vmatpush1.xpose.msra.mxu0 0.0
        %769 = vmatprep.subr.mxu0 0.0
        %770 = vmatpush1.xpose.msra.mxu0 0.0
        %771 = vmatprep.subr.mxu0 0.0
        %772 = vmatpush1.xpose.msra.mxu0 0.0
        %773 = vmatprep.subr.mxu0 0.0
        %774 = vmatpush1.xpose.msra.mxu0 0.0
        %775 = vmatprep.subr.mxu0 0.0
        %776 = vmatpush1.xpose.msra.mxu0 0.0
        %777 = vmatprep.subr.mxu0 0.0
        %778 = vmatpush1.xpose.msra.mxu0 0.0
        %779 = vmatprep.subr.mxu0 0.0
        %780 = vmatpush1.xpose.msra.mxu0 0.0
        %781 = vmatprep.subr.mxu0 0.0
        %782 = vmatpush1.xpose.msra.mxu0 0.0
        %783 = vmatprep.subr.mxu0 0.0
        %784 = vmatpush1.xpose.msra.mxu0 0.0
        %785 = vmatprep.subr.mxu0 0.0
        %786 = vmatpush1.xpose.msra.mxu0 0.0
        %787 = vmatprep.subr.mxu0 0.0
        %788 = vmatpush1.xpose.msra.mxu0 0.0
        %789 = vmatprep.subr.mxu0 0.0
        %790 = vmatpush1.xpose.msra.mxu0 0.0
        %791 = vmatprep.subr.mxu0 0.0
        %792 = vmatpush1.xpose.msra.mxu0 0.0
        %793 = vmatprep.subr.mxu0 0.0
        %794 = vmatpush1.xpose.msra.mxu0 0.0
        %795 = vmatprep.subr.mxu0 0.0
        %796 = vmatpush1.xpose.msra.mxu0 0.0
        %797 = vmatprep.subr.mxu0 0.0
        %798 = vmatpush1.xpose.msra.mxu0 0.0
        %799 = vmatprep.mubr.f32.mxu0 0.0
        %800 = vmatmul.mubr.f32.gmra.mrb[0].mxu0 %v731
        %v801 = vpop.f32.mrb[0].mxu0
        %v802 = vadd.f32 0.0, %v801
        %v803 = vpop.f32.mrb[0].mxu0
        %804 = vdwg.mxu0
        %v805 = vsel %vm378, %v802, -1e+30
        %v806 = vsel %vm459, %v805, -inf
        %807 = vmax.xlane.f32.xlu0 %v806
        %v808 = vpop.xlane.xlu0 %807
        %v809 = vsub.f32 %v805, %v808
        %v810 = vmul.f32 %v809, 1.442695
        %v811 = vpow.pop %v810
        %v812 = vsel %vm459, %v811, 0.0
        %813 = vadd.xlane.f32.xlu0 %v812
        %v814 = vpop.xlane.xlu0 %813
        %v815 = vrcp.pop %v814
        %v816 = vmul.f32 %v811, %v815
        %s817 = scalar_lea.vmem %s187, 16 [#allocation3]
        %818 = vst.msk [vmem:[%s817] sm:$0xff] %vm459, %v816
        %820 = vrot.lane.b32.xlu0 %v725, 64
        %v821 = vpop.permute.xlu0 %820
        %v824 = vsel %vm459, %v816, 0
        %826 = vmatprep.subr.mxu0 0.0
        %827 = vmatpush1.msra.mxu0 %v821
        %828 = vmatprep.subr.mxu0 0.0
        %829 = vmatpush1.msra.mxu0 0.0
        %830 = vmatprep.subr.mxu0 0.0
        %831 = vmatpush1.msra.mxu0 0.0
        %832 = vmatprep.subr.mxu0 0.0
        %833 = vmatpush1.msra.mxu0 0.0
        %834 = vmatprep.subr.mxu0 0.0
        %835 = vmatpush1.msra.mxu0 0.0
        %836 = vmatprep.subr.mxu0 0.0
        %837 = vmatpush1.msra.mxu0 0.0
        %838 = vmatprep.subr.mxu0 0.0
        %839 = vmatpush1.msra.mxu0 0.0
        %840 = vmatprep.subr.mxu0 0.0
        %841 = vmatpush1.msra.mxu0 0.0
        %842 = vmatprep.subr.mxu0 0.0
        %843 = vmatpush1.msra.mxu0 0.0
        %844 = vmatprep.subr.mxu0 0.0
        %845 = vmatpush1.msra.mxu0 0.0
        %846 = vmatprep.subr.mxu0 0.0
        %847 = vmatpush1.msra.mxu0 0.0
        %848 = vmatprep.subr.mxu0 0.0
        %849 = vmatpush1.msra.mxu0 0.0
        %850 = vmatprep.subr.mxu0 0.0
        %851 = vmatpush1.msra.mxu0 0.0
        %852 = vmatprep.subr.mxu0 0.0
        %853 = vmatpush1.msra.mxu0 0.0
        %854 = vmatprep.subr.mxu0 0.0
        %855 = vmatpush1.msra.mxu0 0.0
        %856 = vmatprep.subr.mxu0 0.0
        %857 = vmatpush1.msra.mxu0 0.0
        %858 = vmatprep.subr.mxu0 0.0
        %859 = vmatpush1.msra.mxu0 0.0
        %860 = vmatprep.subr.mxu0 0.0
        %861 = vmatpush1.msra.mxu0 0.0
        %862 = vmatprep.subr.mxu0 0.0
        %863 = vmatpush1.msra.mxu0 0.0
        %864 = vmatprep.subr.mxu0 0.0
        %865 = vmatpush1.msra.mxu0 0.0
        %866 = vmatprep.subr.mxu0 0.0
        %867 = vmatpush1.msra.mxu0 0.0
        %868 = vmatprep.subr.mxu0 0.0
        %869 = vmatpush1.msra.mxu0 0.0
        %870 = vmatprep.subr.mxu0 0.0
        %871 = vmatpush1.msra.mxu0 0.0
        %872 = vmatprep.subr.mxu0 0.0
        %873 = vmatpush1.msra.mxu0 0.0
        %874 = vmatprep.subr.mxu0 0.0
        %875 = vmatpush1.msra.mxu0 0.0
        %876 = vmatprep.subr.mxu0 0.0
        %877 = vmatpush1.msra.mxu0 0.0
        %878 = vmatprep.subr.mxu0 0.0
        %879 = vmatpush1.msra.mxu0 0.0
        %880 = vmatprep.subr.mxu0 0.0
        %881 = vmatpush1.msra.mxu0 0.0
        %882 = vmatprep.subr.mxu0 0.0
        %883 = vmatpush1.msra.mxu0 0.0
        %884 = vmatprep.subr.mxu0 0.0
        %885 = vmatpush1.msra.mxu0 0.0
        %886 = vmatprep.subr.mxu0 0.0
        %887 = vmatpush1.msra.mxu0 0.0
        %888 = vmatprep.subr.mxu0 0.0
        %889 = vmatpush1.msra.mxu0 0.0
        %890 = vmatprep.mubr.f32.mxu0 0.0
        %891 = vmatmul.mubr.f32.gmra.mrb[0].mxu0 %v824
        %v892 = vpop.f32.mrb[0].mxu0
        %v893 = vadd.f32 0.0, %v892
        %v894 = vpop.f32.mrb[0].mxu0
        %895 = vdwg.mxu0
        %897 = vrot.lane.b32.xlu0 %v893, 64
        %v898 = vpop.permute.xlu0 %897
        %vm900 = vcmask 785920
        %901 = vst.msk [vmem:[%s198] sm:$0xff] %vm900, %v898
        %v902 = vld [vmem:[#allocation2 + $0x8] sm:$0xff]
        %v903 = vld [vmem:[#allocation2 + $0x10] sm:$0xff]
        %904 = vrot.lane.b32.xlu0 %v371, 32
        %v905 = vpop.permute.xlu0 %904
        %907 = vrot.lane.b32.xlu0 %v902, 32
        %v908 = vpop.permute.xlu0 %907
        %v909 = vsel %vm381, %v905, 0
        %v911 = vsel %vm381, %v908, 0
        %913 = vmatprep.subr.mxu0 0.0
        %914 = vmatpush1.xpose.msra.mxu0 %v911
        %915 = vmatprep.subr.mxu0 0.0
        %916 = vmatpush1.xpose.msra.mxu0 0.0
        %917 = vmatprep.subr.mxu0 0.0
        %918 = vmatpush1.xpose.msra.mxu0 0.0
        %919 = vmatprep.subr.mxu0 0.0
        %920 = vmatpush1.xpose.msra.mxu0 0.0
        %921 = vmatprep.subr.mxu0 0.0
        %922 = vmatpush1.xpose.msra.mxu0 0.0
        %923 = vmatprep.subr.mxu0 0.0
        %924 = vmatpush1.xpose.msra.mxu0 0.0
        %925 = vmatprep.subr.mxu0 0.0
        %926 = vmatpush1.xpose.msra.mxu0 0.0
        %927 = vmatprep.subr.mxu0 0.0
        %928 = vmatpush1.xpose.msra.mxu0 0.0
        %929 = vmatprep.subr.mxu0 0.0
        %930 = vmatpush1.xpose.msra.mxu0 0.0
        %931 = vmatprep.subr.mxu0 0.0
        %932 = vmatpush1.xpose.msra.mxu0 0.0
        %933 = vmatprep.subr.mxu0 0.0
        %934 = vmatpush1.xpose.msra.mxu0 0.0
        %935 = vmatprep.subr.mxu0 0.0
        %936 = vmatpush1.xpose.msra.mxu0 0.0
        %937 = vmatprep.subr.mxu0 0.0
        %938 = vmatpush1.xpose.msra.mxu0 0.0
        %939 = vmatprep.subr.mxu0 0.0
        %940 = vmatpush1.xpose.msra.mxu0 0.0
        %941 = vmatprep.subr.mxu0 0.0
        %942 = vmatpush1.xpose.msra.mxu0 0.0
        %943 = vmatprep.subr.mxu0 0.0
        %944 = vmatpush1.xpose.msra.mxu0 0.0
        %945 = vmatprep.subr.mxu0 0.0
        %946 = vmatpush1.xpose.msra.mxu0 0.0
        %947 = vmatprep.subr.mxu0 0.0
        %948 = vmatpush1.xpose.msra.mxu0 0.0
        %949 = vmatprep.subr.mxu0 0.0
        %950 = vmatpush1.xpose.msra.mxu0 0.0
        %951 = vmatprep.subr.mxu0 0.0
        %952 = vmatpush1.xpose.msra.mxu0 0.0
        %953 = vmatprep.subr.mxu0 0.0
        %954 = vmatpush1.xpose.msra.mxu0 0.0
        %955 = vmatprep.subr.mxu0 0.0
        %956 = vmatpush1.xpose.msra.mxu0 0.0
        %957 = vmatprep.subr.mxu0 0.0
        %958 = vmatpush1.xpose.msra.mxu0 0.0
        %959 = vmatprep.subr.mxu0 0.0
        %960 = vmatpush1.xpose.msra.mxu0 0.0
        %961 = vmatprep.subr.mxu0 0.0
        %962 = vmatpush1.xpose.msra.mxu0 0.0
        %963 = vmatprep.subr.mxu0 0.0
        %964 = vmatpush1.xpose.msra.mxu0 0.0
        %965 = vmatprep.subr.mxu0 0.0
        %966 = vmatpush1.xpose.msra.mxu0 0.0
        %967 = vmatprep.subr.mxu0 0.0
        %968 = vmatpush1.xpose.msra.mxu0 0.0
        %969 = vmatprep.subr.mxu0 0.0
        %970 = vmatpush1.xpose.msra.mxu0 0.0
        %971 = vmatprep.subr.mxu0 0.0
        %972 = vmatpush1.xpose.msra.mxu0 0.0
        %973 = vmatprep.subr.mxu0 0.0
        %974 = vmatpush1.xpose.msra.mxu0 0.0
        %975 = vmatprep.subr.mxu0 0.0
        %976 = vmatpush1.xpose.msra.mxu0 0.0
        %977 = vmatprep.mubr.f32.mxu0 0.0
        %978 = vmatmul.mubr.f32.gmra.mrb[0].mxu0 %v909
        %v979 = vpop.f32.mrb[0].mxu0
        %v980 = vadd.f32 0.0, %v979
        %v981 = vpop.f32.mrb[0].mxu0
        %982 = vdwg.mxu0
        %v983 = vsel %vm378, %v980, -1e+30
        %v984 = vsel %vm459, %v983, -inf
        %985 = vmax.xlane.f32.xlu0 %v984
        %v986 = vpop.xlane.xlu0 %985
        %v987 = vsub.f32 %v983, %v986
        %v988 = vmul.f32 %v987, 1.442695
        %v989 = vpow.pop %v988
        %v990 = vsel %vm459, %v989, 0.0
        %991 = vadd.xlane.f32.xlu0 %v990
        %v992 = vpop.xlane.xlu0 %991
        %v993 = vrcp.pop %v992
        %v994 = vmul.f32 %v989, %v993
        %s995 = scalar_lea.vmem %s187, 24 [#allocation3]
        %996 = vst.msk [vmem:[%s995] sm:$0xff] %vm459, %v994
        %998 = vrot.lane.b32.xlu0 %v903, 32
        %v999 = vpop.permute.xlu0 %998
        %v1002 = vsel %vm459, %v994, 0
        %1004 = vmatprep.subr.mxu0 0.0
        %1005 = vmatpush1.msra.mxu0 %v999
        %1006 = vmatprep.subr.mxu0 0.0
        %1007 = vmatpush1.msra.mxu0 0.0
        %1008 = vmatprep.subr.mxu0 0.0
        %1009 = vmatpush1.msra.mxu0 0.0
        %1010 = vmatprep.subr.mxu0 0.0
        %1011 = vmatpush1.msra.mxu0 0.0
        %1012 = vmatprep.subr.mxu0 0.0
        %1013 = vmatpush1.msra.mxu0 0.0
        %1014 = vmatprep.subr.mxu0 0.0
        %1015 = vmatpush1.msra.mxu0 0.0
        %1016 = vmatprep.subr.mxu0 0.0
        %1017 = vmatpush1.msra.mxu0 0.0
        %1018 = vmatprep.subr.mxu0 0.0
        %1019 = vmatpush1.msra.mxu0 0.0
        %1020 = vmatprep.subr.mxu0 0.0
        %1021 = vmatpush1.msra.mxu0 0.0
        %1022 = vmatprep.subr.mxu0 0.0
        %1023 = vmatpush1.msra.mxu0 0.0
        %1024 = vmatprep.subr.mxu0 0.0
        %1025 = vmatpush1.msra.mxu0 0.0
        %1026 = vmatprep.subr.mxu0 0.0
        %1027 = vmatpush1.msra.mxu0 0.0
        %1028 = vmatprep.subr.mxu0 0.0
        %1029 = vmatpush1.msra.mxu0 0.0
        %1030 = vmatprep.subr.mxu0 0.0
        %1031 = vmatpush1.msra.mxu0 0.0
        %1032 = vmatprep.subr.mxu0 0.0
        %1033 = vmatpush1.msra.mxu0 0.0
        %1034 = vmatprep.subr.mxu0 0.0
        %1035 = vmatpush1.msra.mxu0 0.0
        %1036 = vmatprep.subr.mxu0 0.0
        %1037 = vmatpush1.msra.mxu0 0.0
        %1038 = vmatprep.subr.mxu0 0.0
        %1039 = vmatpush1.msra.mxu0 0.0
        %1040 = vmatprep.subr.mxu0 0.0
        %1041 = vmatpush1.msra.mxu0 0.0
        %1042 = vmatprep.subr.mxu0 0.0
        %1043 = vmatpush1.msra.mxu0 0.0
        %1044 = vmatprep.subr.mxu0 0.0
        %1045 = vmatpush1.msra.mxu0 0.0
        %1046 = vmatprep.subr.mxu0 0.0
        %1047 = vmatpush1.msra.mxu0 0.0
        %1048 = vmatprep.subr.mxu0 0.0
        %1049 = vmatpush1.msra.mxu0 0.0
        %1050 = vmatprep.subr.mxu0 0.0
        %1051 = vmatpush1.msra.mxu0 0.0
        %1052 = vmatprep.subr.mxu0 0.0
        %1053 = vmatpush1.msra.mxu0 0.0
        %1054 = vmatprep.subr.mxu0 0.0
        %1055 = vmatpush1.msra.mxu0 0.0
        %1056 = vmatprep.subr.mxu0 0.0
        %1057 = vmatpush1.msra.mxu0 0.0
        %1058 = vmatprep.subr.mxu0 0.0
        %1059 = vmatpush1.msra.mxu0 0.0
        %1060 = vmatprep.subr.mxu0 0.0
        %1061 = vmatpush1.msra.mxu0 0.0
        %1062 = vmatprep.subr.mxu0 0.0
        %1063 = vmatpush1.msra.mxu0 0.0
        %1064 = vmatprep.subr.mxu0 0.0
        %1065 = vmatpush1.msra.mxu0 0.0
        %1066 = vmatprep.subr.mxu0 0.0
        %1067 = vmatpush1.msra.mxu0 0.0
        %1068 = vmatprep.mubr.f32.mxu0 0.0
        %1069 = vmatmul.mubr.f32.gmra.mrb[0].mxu0 %v1002
        %v1070 = vpop.f32.mrb[0].mxu0
        %v1071 = vadd.f32 0.0, %v1070
        %v1072 = vpop.f32.mrb[0].mxu0
        %1073 = vdwg.mxu0
        %1075 = vrot.lane.b32.xlu0 %v1071, 96
        %v1076 = vpop.permute.xlu0 %1075
        %vm1078 = vcmask 1048320
        %1079 = vst.msk [vmem:[%s198] sm:$0xff] %vm1078, %v1076
        %p1080 = scmp.lt.s32.totalorder %s22, 1
        %s1081 = scalar_select %p1080, %s22, 1
        %p1082 = scmp.lt.s32.totalorder %s23, 0
        %s1083 = scalar_select %p1082, %s23, 0
        %s1084 = sadd.s32 %s1083, %s1081
        %s1085 = smul.addr %s1084, 8
        %s1086 = scalar_lea.vmem %s2, %s1085
        %s1087 = sand.u32 %s115, 1
        %s1088 = scalar_lea.sflag [#allocation4], %s1087
        %s1089 = sand.u32 %s115, 1
        %s1090 = smul.addr %s1089, 32
        %s1091 = scalar_lea.vmem [#allocation3], %s1090
        // Predicated region
        $region33: #{stacked_masked_self_attention.1} parent=27 // pred_check
          %p1092 = pneg %p97
        $region34: #{stacked_masked_self_attention.1} parent=27 // pred_check_branch
          %1094 = sbr.rel (%p1092) target = $region36
        $region35: #{stacked_masked_self_attention.1} parent=27 // pred_region
          _
        $region36: #{stacked_masked_self_attention.1} parent=27 // pred_fallthru
          _
        // Predicated region
        $region37: #{stacked_masked_self_attention.1} parent=27 // pred_check
          %p1095 = pneg %p125
        $region38: #{stacked_masked_self_attention.1} parent=27 // pred_check_branch
          %1097 = sbr.rel (%p1095) target = $region40
        $region39: #{stacked_masked_self_attention.1} parent=27 // pred_region
          %s1099 = ssub.s32 512, 512
          %1100 = vsyncadd %s1088, %s1099
          %s1101 = smul.addr %s22, 4
          %s1102 = sadd.s32 %s23, %s1101
          %s1103 = smul.addr %s1102, 128
          %s1104 = scalar_lea.hbm %s3, %s1103
          %s1105 = sshll.u32 %s1091, 4
          %s1106 = int_to_ptr.vmem [resolvable:$true] %s1105
          %1111 = dma.vmem_to_hbm [thread:$0]  %s1106, 512, %s1104, %s1088, 128, 128, 8
        $region40: #{stacked_masked_self_attention.1} parent=27 // pred_fallthru
          _
      $region28: #{stacked_masked_self_attention.1} parent=5 // pred_fallthru
        _
      %p1112 = scmp.le.s32.totalorder 2, %s13
      // Predicated region
      $region41: #{stacked_masked_self_attention.1} parent=5 // pred_check
        %p1113 = pneg %p1112
      $region42: #{stacked_masked_self_attention.1} parent=5 // pred_check_branch
        %1115 = sbr.rel (%p1113) target = $region44
      $region43: #{stacked_masked_self_attention.1} parent=5 // pred_region
        %s1116 = ssub.s32 %s13, 2
        // Predicated region
        $region45: #{stacked_masked_self_attention.1} parent=43 // pred_check
          %p1117 = pneg %p103
        $region46: #{stacked_masked_self_attention.1} parent=43 // pred_check_branch
          %1119 = sbr.rel (%p1117) target = $region48
        $region47: #{stacked_masked_self_attention.1} parent=43 // pred_region
          %p1120 = scmp.lt.s32.totalorder %s24, 1
          %s1121 = scalar_select %p1120, %s24, 1
          %p1122 = scmp.lt.s32.totalorder %s25, 0
          %s1123 = scalar_select %p1122, %s25, 0
          %s1124 = sadd.s32 %s1123, %s1121
          %s1125 = smul.addr %s1124, 8
          %s1126 = scalar_lea.vmem %s2, %s1125
        $region48: #{stacked_masked_self_attention.1} parent=43 // pred_fallthru
          _
        // Predicated region
        $region49: #{stacked_masked_self_attention.1} parent=43 // pred_check
          %p1127 = pneg %p131
        $region50: #{stacked_masked_self_attention.1} parent=43 // pred_check_branch
          %1129 = sbr.rel (%p1127) target = $region52
        $region51: #{stacked_masked_self_attention.1} parent=43 // pred_region
          %s1130 = sand.u32 %s116, 1
          %s1131 = scalar_lea.sflag [#allocation4], %s1130
          %s1132 = sand.u32 %s116, 1
          %s1133 = smul.addr %s1132, 32
          %s1134 = scalar_lea.vmem [#allocation3], %s1133
          %1135 = dma.done %s1131, 512
        $region52: #{stacked_masked_self_attention.1} parent=43 // pred_fallthru
          _
      $region44: #{stacked_masked_self_attention.1} parent=5 // pred_fallthru
        _
    $region6: #{stacked_masked_self_attention.1} parent=1 // loop_footer
      %s17 = sadd.s32 1, %s13
    $region7: #{stacked_masked_self_attention.1} parent=1 // loop_footer_branch
      %12 = sbr.rel target = $region3
    $region8: #{stacked_masked_self_attention.1} parent=1 // loop_exit
      _
    %1136 = vsyncpa [#allocation4], 1
    %s1137 = scalar_lea.sflag [#allocation4], 1
    %1138 = vsyncpa %s1137, 1

</llo_original>
